<compile_context>
chip_gen: v5e
topology: v5e:2x2
jax: 0.10.0
libtpu: 0.0.40
codegen_flags: <defaults>
</compile_context>

<pallas_src>
import jax
import jax.numpy as jnp
from jax.experimental import pallas as pl
from jax.experimental.pallas import tpu as pltpu

B = 2            # batch
C = 32           # channels
L = 16           # sequence length (Conv1d spatial dim)
RATIO = 16       # ChannelAttention ratio -> MLP hidden = C // RATIO = 2
SLAB_LANES = 128 # lane-dense packed parameter slab width


# ---------------------------------------------------------------------------
# Pallas kernel
# ---------------------------------------------------------------------------
def resblock_kernel(x_ref, wconv_ref, slab_ref, out_ref):
    """x_ref/out_ref: (B, C, L) torch Conv1d layout.
    wconv_ref: (2, C, 3C) im2col conv weights [conv1, conv2].
    slab_ref:  (C, 128) packed: [W1p | W2p | b1 b2 mb1 mb2 | zeros]."""
    bsz, ch, ln = x_ref.shape
    bl = bsz * ln

    # Packed parameters (static slices of one lane-dense slab).
    w1p = slab_ref[:, 0:ch]                       # (C, C) MLP W1, rows >= hid zero
    w2p = slab_ref[:, ch:2 * ch]                  # (C, C) MLP W2, cols >= hid zero
    b1  = slab_ref[:, 2 * ch + 0:2 * ch + 1]      # (C, 1) conv1 bias
    b2  = slab_ref[:, 2 * ch + 1:2 * ch + 2]      # (C, 1) conv2 bias
    mb1 = slab_ref[:, 2 * ch + 2:2 * ch + 3]      # (C, 1) MLP bias1 (zero-padded)
    mb2 = slab_ref[:, 2 * ch + 3:2 * ch + 4]      # (C, 1) MLP bias2

    # Activations in channels-first (C, B*L) layout; lane j = b*L + l.
    x2 = jnp.concatenate([x_ref[i] for i in range(bsz)], axis=1)       # (C, B*L)

    # Masks zeroing the sequence-boundary lanes of the rolled tensors
    # (also prevents leakage across the batch boundary of the flat lane axis).
    col = jax.lax.broadcasted_iota(jnp.int32, (ch, bl), 1)
    first_lane = (col % ln) == 0
    last_lane = (col % ln) == (ln - 1)

    def conv3(inp, w, bias):
        # Conv1d(kernel=3, padding=1) as a single im2col matmul.
        x_prev = jnp.where(first_lane, 0.0, pltpu.roll(inp, shift=1, axis=1))
        x_next = jnp.where(last_lane, 0.0, pltpu.roll(inp, shift=bl - 1, axis=1))
        cols = jnp.concatenate([x_prev, inp, x_next], axis=0)          # (3C, B*L)
        return jnp.dot(w, cols, preferred_element_type=jnp.float32) + bias

    # res_unit: Conv -> Identity -> ReLU -> Conv -> Identity
    h = conv3(x2, wconv_ref[0], b1)
    h = jnp.maximum(h, 0.0)
    h = conv3(h, wconv_ref[1], b2)

    # ChannelAttention: per-batch avg/max pool over L, one shared-MLP pass on
    # the stacked (C, 2B) matrix [avg_0..avg_{B-1} | max_0..max_{B-1}].
    avgs = [jnp.mean(h[:, i * ln:(i + 1) * ln], axis=1, keepdims=True)
            for i in range(bsz)]
    maxs = [jnp.max(h[:, i * ln:(i + 1) * ln], axis=1, keepdims=True)
            for i in range(bsz)]
    pooled = jnp.concatenate(avgs + maxs, axis=1)                      # (C, 2B)
    hid = jnp.maximum(
        jnp.dot(w1p, pooled, preferred_element_type=jnp.float32) + mb1, 0.0)
    mo = jnp.dot(w2p, hid, preferred_element_type=jnp.float32) + mb2   # (C, 2B)
    ca = jax.nn.sigmoid(mo[:, :bsz] + mo[:, bsz:])                     # (C, B)

    # Gate * res_unit output + residual, then post-activation (pre_actv=False).
    gate = jnp.concatenate(
        [jnp.broadcast_to(ca[:, i:i + 1], (ch, ln)) for i in range(bsz)], axis=1)
    out = jnp.maximum(gate * h + x2, 0.0)                              # (C, B*L)
    for i in range(bsz):
        out_ref[i] = out[:, i * ln:(i + 1) * ln]                       # (C, L)


# ---------------------------------------------------------------------------
# One-time parameter packing (hoisted out of the per-call path)
# ---------------------------------------------------------------------------
def pack_params(params):
    hid = C // RATIO

    def conv_w(w):
        # torch (C_out, C_in, 3) -> (C_out, 3*C_in) matching [x_prev | x | x_next] rows.
        return jnp.transpose(w, (0, 2, 1)).reshape(C, 3 * C)

    wconv = jnp.stack([conv_w(params["conv1_w"]), conv_w(params["conv2_w"])], axis=0)

    slab = jnp.zeros((C, SLAB_LANES), jnp.float32)
    slab = slab.at[:hid, 0:C].set(params["mlp_w1"])        # W1 (hid, C), zero-pad rows
    slab = slab.at[:, C:C + hid].set(params["mlp_w2"])     # W2 (C, hid), zero-pad cols
    slab = slab.at[:, 2 * C + 0].set(params["conv1_b"])
    slab = slab.at[:, 2 * C + 1].set(params["conv2_b"])
    slab = slab.at[:hid, 2 * C + 2].set(params["mlp_b1"])
    slab = slab.at[:, 2 * C + 3].set(params["mlp_b2"])
    return wconv, slab


@jax.jit
def resblock_forward(x_bcl, wconv, slab):
    """x_bcl: (B, C, L) f32 -> (B, C, L) f32."""
    vmem = pl.BlockSpec(memory_space=pltpu.MemorySpace.VMEM)
    return pl.pallas_call(
        resblock_kernel,
        out_shape=jax.ShapeDtypeStruct((B, C, L), jnp.float32),
        in_specs=[vmem, vmem, vmem],
        out_specs=vmem,
    )(x_bcl, wconv, slab)


# ---------------------------------------------------------------------------
# Pure-JAX reference (torch semantics, (B, C, L) layout)
# ---------------------------------------------------------------------------
def resblock_reference(x, p):
    hp = jax.lax.Precision.HIGHEST

    def conv1d(inp, w, bias):
        xp = jnp.pad(inp, ((0, 0), (0, 0), (1, 1)))
        out = sum(jnp.einsum("oc,bcl->bol", w[:, :, k], xp[:, :, k:k + L], precision=hp)
                  for k in range(3))
        return out + bias[None, :, None]

    h = conv1d(x, p["conv1_w"], p["conv1_b"])
    h = jnp.maximum(h, 0.0)
    h = conv1d(h, p["conv2_w"], p["conv2_b"])
    avg = h.mean(axis=2)
    mx = h.max(axis=2)

    def mlp(v):
        hh = jnp.maximum(jnp.matmul(v, p["mlp_w1"].T, precision=hp) + p["mlp_b1"], 0.0)
        return jnp.matmul(hh, p["mlp_w2"].T, precision=hp) + p["mlp_b2"]

    ca = jax.nn.sigmoid(mlp(avg) + mlp(mx))              # (B, C)
    out = ca[:, :, None] * h + x
    return jnp.maximum(out, 0.0)


# ---------------------------------------------------------------------------
def init_params(key):
    ks = jax.random.split(key, 8)
    hid = C // RATIO

    def u(k, shape, fan_in):
        s = 1.0 / jnp.sqrt(jnp.float32(fan_in))
        return jax.random.uniform(k, shape, jnp.float32, -s, s)

    return {
        "conv1_w": u(ks[0], (C, C, 3), C * 3),
        "conv1_b": u(ks[1], (C,), C * 3),
        "conv2_w": u(ks[2], (C, C, 3), C * 3),
        "conv2_b": u(ks[3], (C,), C * 3),
        "mlp_w1": u(ks[4], (hid, C), C),       # Linear(C, C//ratio) torch layout
        "mlp_b1": u(ks[5], (hid,), C),
        "mlp_w2": u(ks[6], (C, hid), hid),     # Linear(C//ratio, C) torch layout
        "mlp_b2": u(ks[7], (C,), hid),
    }


if __name__ == "__main__":
    key = jax.random.PRNGKey(0)
    k_param, k_x = jax.random.split(key)
    params = init_params(k_param)
    x = jax.random.normal(k_x, (B, C, L), jnp.float32)   # (batch, channels, length)

    # One-time packing; the hot path is a single pallas_call on packed buffers.
    wconv, slab = pack_params(params)
    wconv, slab = jax.block_until_ready((wconv, slab))

    out = resblock_forward(x, wconv, slab)
    jax.block_until_ready(out)

    ref = resblock_reference(x, params)
    assert out.shape == (B, C, L)
    max_err = float(jnp.max(jnp.abs(out - ref)))
    # f32 vs f32; tolerance covers MXU multi-pass rounding of f32 matmuls.
    assert max_err < 5e-3, f"mismatch vs reference: {max_err}"

    print("KERNEL_OK")
</pallas_src>

<mosaic_0001>
module attributes {stable_mosaic.version = 11 : i64} {
  func.func @resblock_kernel(%arg0: memref<2x32x16xf32, #tpu.memory_space<vmem>>, %arg1: memref<2x32x96xf32, #tpu.memory_space<vmem>>, %arg2: memref<32x128xf32, #tpu.memory_space<vmem>>, %arg3: memref<2x32x16xf32, #tpu.memory_space<vmem>>) attributes {dimension_semantics = [], scalar_prefetch = 0 : i64, scratch_operands = 0 : i64, tpu.core_type = #tpu.core_type<tc>} {
    %c0 = arith.constant 0 : index
    %c0_0 = arith.constant 0 : index
    %0 = vector.load %arg2[%c0, %c0_0] : memref<32x128xf32, #tpu.memory_space<vmem>>, vector<32x32xf32>
    %c0_1 = arith.constant 0 : index
    %c32 = arith.constant 32 : index
    %1 = vector.load %arg2[%c0_1, %c32] : memref<32x128xf32, #tpu.memory_space<vmem>>, vector<32x32xf32>
    %c0_2 = arith.constant 0 : index
    %c64 = arith.constant 64 : index
    %2 = vector.load %arg2[%c0_2, %c64] : memref<32x128xf32, #tpu.memory_space<vmem>>, vector<32x1xf32>
    %c0_3 = arith.constant 0 : index
    %c65 = arith.constant 65 : index
    %3 = vector.load %arg2[%c0_3, %c65] : memref<32x128xf32, #tpu.memory_space<vmem>>, vector<32x1xf32>
    %c0_4 = arith.constant 0 : index
    %c66 = arith.constant 66 : index
    %4 = vector.load %arg2[%c0_4, %c66] : memref<32x128xf32, #tpu.memory_space<vmem>>, vector<32x1xf32>
    %c0_5 = arith.constant 0 : index
    %c67 = arith.constant 67 : index
    %5 = vector.load %arg2[%c0_5, %c67] : memref<32x128xf32, #tpu.memory_space<vmem>>, vector<32x1xf32>
    %c0_6 = arith.constant 0 : index
    %c0_7 = arith.constant 0 : index
    %c0_8 = arith.constant 0 : index
    %6 = vector.load %arg0[%c0_6, %c0_7, %c0_8] : memref<2x32x16xf32, #tpu.memory_space<vmem>>, vector<1x32x16xf32>
    %7 = vector.shape_cast %6 : vector<1x32x16xf32> to vector<32x16xf32>
    %c1 = arith.constant 1 : index
    %c0_9 = arith.constant 0 : index
    %c0_10 = arith.constant 0 : index
    %8 = vector.load %arg0[%c1, %c0_9, %c0_10] : memref<2x32x16xf32, #tpu.memory_space<vmem>>, vector<1x32x16xf32>
    %9 = vector.shape_cast %8 : vector<1x32x16xf32> to vector<32x16xf32>
    %10 = tpu.concatenate %7, %9 in 1 : vector<32x16xf32>, vector<32x16xf32> -> vector<32x32xf32>
    %11 = tpu.iota {dimensions = array<i32: 1>} : vector<32x32xi32>
    %c16_i32 = arith.constant 16 : i32
    %c0_i32 = arith.constant 0 : i32
    %12 = arith.cmpi eq, %c16_i32, %c0_i32 : i32
    %c1_i32 = arith.constant 1 : i32
    %13 = arith.select %12, %c1_i32, %c16_i32 : i32
    %14 = vector.broadcast %13 : i32 to vector<32x32xi32>
    %15 = arith.remsi %11, %14 : vector<32x32xi32>
    %c0_i32_11 = arith.constant 0 : i32
    %16 = vector.broadcast %c0_i32_11 : i32 to vector<32x32xi32>
    %17 = arith.cmpi ne, %15, %16 : vector<32x32xi32>
    %c0_i32_12 = arith.constant 0 : i32
    %18 = vector.broadcast %c0_i32_12 : i32 to vector<32x32xi32>
    %19 = arith.cmpi slt, %15, %18 : vector<32x32xi32>
    %c0_i32_13 = arith.constant 0 : i32
    %20 = arith.cmpi slt, %13, %c0_i32_13 : i32
    %21 = vector.broadcast %20 : i1 to vector<32x32xi1>
    %22 = vector.broadcast %21 : vector<32x32xi1> to vector<32x32xi1>
    %23 = arith.xori %19, %22 : vector<32x32xi1>
    %24 = arith.andi %23, %17 : vector<32x32xi1>
    %25 = vector.broadcast %13 : i32 to vector<32x32xi32>
    %26 = arith.addi %15, %25 : vector<32x32xi32>
    %27 = arith.select %24, %26, %15 : vector<32x32xi1>, vector<32x32xi32>
    %c0_i32_14 = arith.constant 0 : i32
    %28 = vector.broadcast %c0_i32_14 : i32 to vector<32x32xi32>
    %29 = arith.cmpi eq, %27, %28 : vector<32x32xi32>
    %c16_i32_15 = arith.constant 16 : i32
    %c0_i32_16 = arith.constant 0 : i32
    %30 = arith.cmpi eq, %c16_i32_15, %c0_i32_16 : i32
    %c1_i32_17 = arith.constant 1 : i32
    %31 = arith.select %30, %c1_i32_17, %c16_i32_15 : i32
    %32 = vector.broadcast %31 : i32 to vector<32x32xi32>
    %33 = arith.remsi %11, %32 : vector<32x32xi32>
    %c0_i32_18 = arith.constant 0 : i32
    %34 = vector.broadcast %c0_i32_18 : i32 to vector<32x32xi32>
    %35 = arith.cmpi ne, %33, %34 : vector<32x32xi32>
    %c0_i32_19 = arith.constant 0 : i32
    %36 = vector.broadcast %c0_i32_19 : i32 to vector<32x32xi32>
    %37 = arith.cmpi slt, %33, %36 : vector<32x32xi32>
    %c0_i32_20 = arith.constant 0 : i32
    %38 = arith.cmpi slt, %31, %c0_i32_20 : i32
    %39 = vector.broadcast %38 : i1 to vector<32x32xi1>
    %40 = vector.broadcast %39 : vector<32x32xi1> to vector<32x32xi1>
    %41 = arith.xori %37, %40 : vector<32x32xi1>
    %42 = arith.andi %41, %35 : vector<32x32xi1>
    %43 = vector.broadcast %31 : i32 to vector<32x32xi32>
    %44 = arith.addi %33, %43 : vector<32x32xi32>
    %45 = arith.select %42, %44, %33 : vector<32x32xi1>, vector<32x32xi32>
    %c15_i32 = arith.constant 15 : i32
    %46 = vector.broadcast %c15_i32 : i32 to vector<32x32xi32>
    %47 = arith.cmpi eq, %45, %46 : vector<32x32xi32>
    %c0_21 = arith.constant 0 : index
    %c0_22 = arith.constant 0 : index
    %c0_23 = arith.constant 0 : index
    %48 = vector.load %arg1[%c0_21, %c0_22, %c0_23] : memref<2x32x96xf32, #tpu.memory_space<vmem>>, vector<1x32x96xf32>
    %49 = vector.shape_cast %48 : vector<1x32x96xf32> to vector<32x96xf32>
    %c1_i32_24 = arith.constant 1 : i32
    %50 = tpu.dynamic_rotate %10 by %c1_i32_24 dim 1 : vector<32x32xf32>, i32 -> vector<32x32xf32>
    %cst = arith.constant 0.000000e+00 : f32
    %51 = vector.broadcast %cst : f32 to vector<32x32xf32>
    %52 = arith.select %29, %51, %50 : vector<32x32xi1>, vector<32x32xf32>
    %c31_i32 = arith.constant 31 : i32
    %53 = tpu.dynamic_rotate %10 by %c31_i32 dim 1 : vector<32x32xf32>, i32 -> vector<32x32xf32>
    %cst_25 = arith.constant 0.000000e+00 : f32
    %54 = vector.broadcast %cst_25 : f32 to vector<32x32xf32>
    %55 = arith.select %47, %54, %53 : vector<32x32xi1>, vector<32x32xf32>
    %56 = tpu.concatenate %52, %10, %55 in 0 : vector<32x32xf32>, vector<32x32xf32>, vector<32x32xf32> -> vector<96x32xf32>
    %cst_26 = arith.constant dense<0.000000e+00> : vector<32x32xf32>
    %57 = tpu.matmul %49, %56, %cst_26 {dimension_numbers = #tpu.dot_dimension_numbers<[1], [0], [0], [1], [0, 0, 1, 1], [], []>} : vector<32x96xf32>, vector<96x32xf32>, vector<32x32xf32> -> vector<32x32xf32>
    %58 = vector.broadcast %2 : vector<32x1xf32> to vector<32x32xf32>
    %59 = arith.addf %57, %58 : vector<32x32xf32>
    %cst_27 = arith.constant 0.000000e+00 : f32
    %60 = vector.broadcast %cst_27 : f32 to vector<32x32xf32>
    %61 = arith.maximumf %59, %60 : vector<32x32xf32>
    %c1_28 = arith.constant 1 : index
    %c0_29 = arith.constant 0 : index
    %c0_30 = arith.constant 0 : index
    %62 = vector.load %arg1[%c1_28, %c0_29, %c0_30] : memref<2x32x96xf32, #tpu.memory_space<vmem>>, vector<1x32x96xf32>
    %63 = vector.shape_cast %62 : vector<1x32x96xf32> to vector<32x96xf32>
    %c1_i32_31 = arith.constant 1 : i32
    %64 = tpu.dynamic_rotate %61 by %c1_i32_31 dim 1 : vector<32x32xf32>, i32 -> vector<32x32xf32>
    %cst_32 = arith.constant 0.000000e+00 : f32
    %65 = vector.broadcast %cst_32 : f32 to vector<32x32xf32>
    %66 = arith.select %29, %65, %64 : vector<32x32xi1>, vector<32x32xf32>
    %c31_i32_33 = arith.constant 31 : i32
    %67 = tpu.dynamic_rotate %61 by %c31_i32_33 dim 1 : vector<32x32xf32>, i32 -> vector<32x32xf32>
    %cst_34 = arith.constant 0.000000e+00 : f32
    %68 = vector.broadcast %cst_34 : f32 to vector<32x32xf32>
    %69 = arith.select %47, %68, %67 : vector<32x32xi1>, vector<32x32xf32>
    %70 = tpu.concatenate %66, %61, %69 in 0 : vector<32x32xf32>, vector<32x32xf32>, vector<32x32xf32> -> vector<96x32xf32>
    %cst_35 = arith.constant dense<0.000000e+00> : vector<32x32xf32>
    %71 = tpu.matmul %63, %70, %cst_35 {dimension_numbers = #tpu.dot_dimension_numbers<[1], [0], [0], [1], [0, 0, 1, 1], [], []>} : vector<32x96xf32>, vector<96x32xf32>, vector<32x32xf32> -> vector<32x32xf32>
    %72 = vector.broadcast %3 : vector<32x1xf32> to vector<32x32xf32>
    %73 = arith.addf %71, %72 : vector<32x32xf32>
    %74 = vector.extract_strided_slice %73 {offsets = [0, 0], sizes = [32, 16], strides = [1, 1]} : vector<32x32xf32> to vector<32x16xf32>
    %cst_36 = arith.constant dense<0.000000e+00> : vector<32xf32>
    %75 = vector.multi_reduction <add>, %74, %cst_36 [1] : vector<32x16xf32> to vector<32xf32>
    %76 = vector.shape_cast %75 : vector<32xf32> to vector<32x1xf32>
    %cst_37 = arith.constant 1.600000e+01 : f32
    %77 = vector.broadcast %cst_37 : f32 to vector<32x1xf32>
    %78 = arith.divf %76, %77 : vector<32x1xf32>
    %79 = vector.extract_strided_slice %73 {offsets = [0, 16], sizes = [32, 16], strides = [1, 1]} : vector<32x32xf32> to vector<32x16xf32>
    %cst_38 = arith.constant dense<0.000000e+00> : vector<32xf32>
    %80 = vector.multi_reduction <add>, %79, %cst_38 [1] : vector<32x16xf32> to vector<32xf32>
    %81 = vector.shape_cast %80 : vector<32xf32> to vector<32x1xf32>
    %cst_39 = arith.constant 1.600000e+01 : f32
    %82 = vector.broadcast %cst_39 : f32 to vector<32x1xf32>
    %83 = arith.divf %81, %82 : vector<32x1xf32>
    %84 = vector.extract_strided_slice %73 {offsets = [0, 0], sizes = [32, 16], strides = [1, 1]} : vector<32x32xf32> to vector<32x16xf32>
    %cst_40 = arith.constant dense<0xFF800000> : vector<32xf32>
    %85 = vector.multi_reduction <maximumf>, %84, %cst_40 [1] : vector<32x16xf32> to vector<32xf32>
    %86 = vector.shape_cast %85 : vector<32xf32> to vector<32x1xf32>
    %87 = vector.extract_strided_slice %73 {offsets = [0, 16], sizes = [32, 16], strides = [1, 1]} : vector<32x32xf32> to vector<32x16xf32>
    %cst_41 = arith.constant dense<0xFF800000> : vector<32xf32>
    %88 = vector.multi_reduction <maximumf>, %87, %cst_41 [1] : vector<32x16xf32> to vector<32xf32>
    %89 = vector.shape_cast %88 : vector<32xf32> to vector<32x1xf32>
    %90 = tpu.concatenate %78, %83, %86, %89 in 1 : vector<32x1xf32>, vector<32x1xf32>, vector<32x1xf32>, vector<32x1xf32> -> vector<32x4xf32>
    %cst_42 = arith.constant dense<0.000000e+00> : vector<32x4xf32>
    %91 = tpu.matmul %0, %90, %cst_42 {dimension_numbers = #tpu.dot_dimension_numbers<[1], [0], [0], [1], [0, 0, 1, 1], [], []>} : vector<32x32xf32>, vector<32x4xf32>, vector<32x4xf32> -> vector<32x4xf32>
    %92 = vector.broadcast %4 : vector<32x1xf32> to vector<32x4xf32>
    %93 = arith.addf %91, %92 : vector<32x4xf32>
    %cst_43 = arith.constant 0.000000e+00 : f32
    %94 = vector.broadcast %cst_43 : f32 to vector<32x4xf32>
    %95 = arith.maximumf %93, %94 : vector<32x4xf32>
    %cst_44 = arith.constant dense<0.000000e+00> : vector<32x4xf32>
    %96 = tpu.matmul %1, %95, %cst_44 {dimension_numbers = #tpu.dot_dimension_numbers<[1], [0], [0], [1], [0, 0, 1, 1], [], []>} : vector<32x32xf32>, vector<32x4xf32>, vector<32x4xf32> -> vector<32x4xf32>
    %97 = vector.broadcast %5 : vector<32x1xf32> to vector<32x4xf32>
    %98 = arith.addf %96, %97 : vector<32x4xf32>
    %99 = vector.extract_strided_slice %98 {offsets = [0, 0], sizes = [32, 2], strides = [1, 1]} : vector<32x4xf32> to vector<32x2xf32>
    %100 = vector.extract_strided_slice %98 {offsets = [0, 2], sizes = [32, 2], strides = [1, 1]} : vector<32x4xf32> to vector<32x2xf32>
    %101 = arith.addf %99, %100 : vector<32x2xf32>
    %102 = arith.negf %101 : vector<32x2xf32>
    %103 = math.exp %102 : vector<32x2xf32>
    %cst_45 = arith.constant 1.000000e+00 : f32
    %104 = vector.broadcast %cst_45 : f32 to vector<32x2xf32>
    %105 = arith.addf %104, %103 : vector<32x2xf32>
    %106 = arith.divf %104, %105 : vector<32x2xf32>
    %107 = vector.extract_strided_slice %106 {offsets = [0, 0], sizes = [32, 1], strides = [1, 1]} : vector<32x2xf32> to vector<32x1xf32>
    %108 = vector.shape_cast %107 : vector<32x1xf32> to vector<32x1xf32>
    %109 = vector.broadcast %108 : vector<32x1xf32> to vector<32x16xf32>
    %110 = vector.extract_strided_slice %106 {offsets = [0, 1], sizes = [32, 1], strides = [1, 1]} : vector<32x2xf32> to vector<32x1xf32>
    %111 = vector.shape_cast %110 : vector<32x1xf32> to vector<32x1xf32>
    %112 = vector.broadcast %111 : vector<32x1xf32> to vector<32x16xf32>
    %113 = tpu.concatenate %109, %112 in 1 : vector<32x16xf32>, vector<32x16xf32> -> vector<32x32xf32>
    %114 = arith.mulf %113, %73 : vector<32x32xf32>
    %115 = arith.addf %114, %10 : vector<32x32xf32>
    %cst_46 = arith.constant 0.000000e+00 : f32
    %116 = vector.broadcast %cst_46 : f32 to vector<32x32xf32>
    %117 = arith.maximumf %115, %116 : vector<32x32xf32>
    %118 = vector.extract_strided_slice %117 {offsets = [0, 0], sizes = [32, 16], strides = [1, 1]} : vector<32x32xf32> to vector<32x16xf32>
    %c0_47 = arith.constant 0 : index
    %c0_48 = arith.constant 0 : index
    %c0_49 = arith.constant 0 : index
    %119 = vector.load %arg3[%c0_47, %c0_48, %c0_49] : memref<2x32x16xf32, #tpu.memory_space<vmem>>, vector<1x32x16xf32>
    %120 = vector.shape_cast %119 : vector<1x32x16xf32> to vector<32x16xf32>
    %121 = vector.shape_cast %118 : vector<32x16xf32> to vector<1x32x16xf32>
    tpu.vector_store %arg3[%c0_47, %c0_48, %c0_49], %121 {strides = array<i32>} : memref<2x32x16xf32, #tpu.memory_space<vmem>>, vector<1x32x16xf32>,
    %122 = vector.extract_strided_slice %117 {offsets = [0, 16], sizes = [32, 16], strides = [1, 1]} : vector<32x32xf32> to vector<32x16xf32>
    %c1_50 = arith.constant 1 : index
    %c0_51 = arith.constant 0 : index
    %c0_52 = arith.constant 0 : index
    %123 = vector.load %arg3[%c1_50, %c0_51, %c0_52] : memref<2x32x16xf32, #tpu.memory_space<vmem>>, vector<1x32x16xf32>
    %124 = vector.shape_cast %123 : vector<1x32x16xf32> to vector<32x16xf32>
    %125 = vector.shape_cast %122 : vector<32x16xf32> to vector<1x32x16xf32>
    tpu.vector_store %arg3[%c1_50, %c0_51, %c0_52], %125 {strides = array<i32>} : memref<2x32x16xf32, #tpu.memory_space<vmem>>, vector<1x32x16xf32>,
    return
  }
}

</mosaic_0001>

<llo_original>
// kernel: resblock_forward.1
$region0: #{resblock_forward.1}
  #allocation0 [shape = 'u32[]', space=smem, size = 0x4, offset = 0x4, fixed_abs, tag = 'smem constant byte address 0x4 - core index']
  #allocation1 [shape = 'u32[72,128]{1,0:T(1,128)}', space=vmem, size = 0x9000, scoped, tag = 'internal scratch']
  %s0 = inlined_call_operand.vmem [shape: f32[2,32,16], index: 0, kind: input, shape index: {}]
  %s1 = inlined_call_operand.vmem [shape: f32[2,32,96], index: 1, kind: input, shape index: {}]
  %s2 = inlined_call_operand.vmem [shape: f32[32,128], index: 2, kind: input, shape index: {}]
  %s3 = inlined_call_operand.vmem [shape: f32[2,32,16], index: 3, kind: output, shape index: {}]
  %s4 = sld [smem:[#allocation0]]
  $region22: #{resblock_forward.1} parent=0
    _
  %s6 = ssub.s32 1, %s4
  %s7 = scalar_select 0, %s6, %s4
  // Predicated region
  $region2: #{resblock_forward.1} parent=0 // pred_check
    _
  $region3: #{resblock_forward.1} parent=0 // pred_check_branch
    %9 = sbr.rel (0) target = $region5
  $region4: #{resblock_forward.1} parent=0 // pred_region
    _
  $region5: #{resblock_forward.1} parent=0 // pred_fallthru
    _
  // Predicated region
  $region6: #{resblock_forward.1} parent=0 // pred_check
    _
  $region7: #{resblock_forward.1} parent=0 // pred_check_branch
    %11 = sbr.rel (0) target = $region9
  $region8: #{resblock_forward.1} parent=0 // pred_region
    _
  $region9: #{resblock_forward.1} parent=0 // pred_fallthru
    _
  // Predicated region
  $region10: #{resblock_forward.1} parent=0 // pred_check
    _
  $region11: #{resblock_forward.1} parent=0 // pred_check_branch
    %13 = sbr.rel (0) target = $region13
  $region12: #{resblock_forward.1} parent=0 // pred_region
    _
  $region13: #{resblock_forward.1} parent=0 // pred_fallthru
    _
  %v14 = vld [vmem:[%s2] sm:$0xff]
  %v15 = vld [vmem:[%s2 + $0x8] sm:$0xff]
  %v16 = vld [vmem:[%s2 + $0x10] sm:$0xff]
  %v17 = vld [vmem:[%s2 + $0x18] sm:$0xff]
  %v18 = vld [vmem:[%s0] sm:$0xff]
  %v19 = vld [vmem:[%s0 + $0x8] sm:$0xff]
  %v20 = vld [vmem:[%s0 + $0x10] sm:$0xff]
  %v21 = vld [vmem:[%s0 + $0x18] sm:$0xff]
  %s22 = scalar_lea.vmem %s0, 32
  %v23 = vld [vmem:[%s22] sm:$0xff]
  %v24 = vld [vmem:[%s22 + $0x8] sm:$0xff]
  %v25 = vld [vmem:[%s22 + $0x10] sm:$0xff]
  %v26 = vld [vmem:[%s22 + $0x18] sm:$0xff]
  %31 = vrot.lane.b32.xlu0 %v23, 16
  %v32 = vpop.permute.xlu0 %31
  %33 = vrot.lane.b32.xlu0 %v24, 16
  %v34 = vpop.permute.xlu0 %33
  %35 = vrot.lane.b32.xlu0 %v25, 16
  %v36 = vpop.permute.xlu0 %35
  %37 = vrot.lane.b32.xlu0 %v26, 16
  %v38 = vpop.permute.xlu0 %37
  %vm43 = vcmask 130048
  %v44 = vsel %vm43, %v18, %v32
  %v45 = vsel %vm43, %v19, %v34
  %v46 = vsel %vm43, %v20, %v36
  %v47 = vsel %vm43, %v21, %v38
  %v48 = vlaneseq
  %v49 = vand.u32 %v48, 127
  %vm50 = vcmp.lt.s32.totalorder %v49, 0
  %v51 = vsub.s32 0, %v49
  %v52 = vsel %vm50, %v51, %v49
  %v53 = vshrl.u32 %v52, 4
  %v54 = vand.u32 %v52, 15
  %v55 = vsub.s32 0, %v54
  %v56 = vsel %vm50, %v55, %v54
  %vm57 = vcmp.ne.s32.totalorder %v56, 0
  %vm58 = vcmp.lt.s32.totalorder %v56, 0
  %vm59 = vmand %vm58, %vm57
  %v60 = vadd.s32 %v56, 16
  %v61 = vsel %vm59, %v60, %v56
  %vm62 = vcmp.eq.s32.totalorder %v61, 0
  %vm63 = vcmp.eq.s32.totalorder %v61, 15
  %v64 = vld [vmem:[%s1] sm:$0xff]
  %v65 = vld [vmem:[%s1 + $0x8] sm:$0xff]
  %v66 = vld [vmem:[%s1 + $0x10] sm:$0xff]
  %v67 = vld [vmem:[%s1 + $0x18] sm:$0xff]
  %vm68 = vcmask 1047808
  %69 = vrot.lane.b32.xlu0 %v44, 32
  %v70 = vpop.permute.xlu0 %69
  %v71 = vsel %vm68, %v70, %v44
  %72 = vrot.lane.b32.xlu0 %v45, 32
  %v73 = vpop.permute.xlu0 %72
  %v74 = vsel %vm68, %v73, %v45
  %75 = vrot.lane.b32.xlu0 %v46, 32
  %v76 = vpop.permute.xlu0 %75
  %v77 = vsel %vm68, %v76, %v46
  %78 = vrot.lane.b32.xlu0 %v47, 32
  %v79 = vpop.permute.xlu0 %78
  %v80 = vsel %vm68, %v79, %v47
  %81 = vrot.lane.b32.xlu0 %v71, 32
  %v82 = vpop.permute.xlu0 %81
  %83 = vrot.lane.b32.xlu0 %v74, 32
  %v84 = vpop.permute.xlu0 %83
  %85 = vrot.lane.b32.xlu0 %v77, 32
  %v86 = vpop.permute.xlu0 %85
  %87 = vrot.lane.b32.xlu0 %v80, 32
  %v88 = vpop.permute.xlu0 %87
  %v89 = vsel %vm68, %v82, %v44
  %v90 = vsel %vm68, %v84, %v45
  %v91 = vsel %vm68, %v86, %v46
  %v92 = vsel %vm68, %v88, %v47
  %97 = vrot.lane.b32.xlu0 %v89, 97
  %v98 = vpop.permute.xlu0 %97
  %99 = vrot.lane.b32.xlu0 %v90, 97
  %v100 = vpop.permute.xlu0 %99
  %101 = vrot.lane.b32.xlu0 %v91, 97
  %v102 = vpop.permute.xlu0 %101
  %103 = vrot.lane.b32.xlu0 %v92, 97
  %v104 = vpop.permute.xlu0 %103
  %v109 = vsel %vm62, 0.0, %v98
  %v110 = vsel %vm62, 0.0, %v100
  %v111 = vsel %vm62, 0.0, %v102
  %v112 = vsel %vm62, 0.0, %v104
  %113 = vrot.lane.b32.xlu0 %v89, 127
  %v114 = vpop.permute.xlu0 %113
  %115 = vrot.lane.b32.xlu0 %v90, 127
  %v116 = vpop.permute.xlu0 %115
  %117 = vrot.lane.b32.xlu0 %v91, 127
  %v118 = vpop.permute.xlu0 %117
  %119 = vrot.lane.b32.xlu0 %v92, 127
  %v120 = vpop.permute.xlu0 %119
  %v125 = vsel %vm63, 0.0, %v114
  %v126 = vsel %vm63, 0.0, %v116
  %v127 = vsel %vm63, 0.0, %v118
  %v128 = vsel %vm63, 0.0, %v120
  %130 = vset.pattern.permute.xlu0 64
  %131 = vperm.xlu0 %130, %v14
  %v132 = vpop.permute.xlu0 %131
  %135 = vset.pattern.permute.xlu0 64
  %136 = vperm.xlu0 %135, %v15
  %v137 = vpop.permute.xlu0 %136
  %140 = vset.pattern.permute.xlu0 64
  %141 = vperm.xlu0 %140, %v16
  %v142 = vpop.permute.xlu0 %141
  %145 = vset.pattern.permute.xlu0 64
  %146 = vperm.xlu0 %145, %v17
  %v147 = vpop.permute.xlu0 %146
  %vm149 = vcmask 785408
  %v151 = vsel %vm149, %v64, 0
  %v154 = vsel %vm149, %v65, 0
  %v157 = vsel %vm149, %v66, 0
  %v160 = vsel %vm149, %v67, 0
  %162 = vmatpush.msra.mxu0 0.0
  %163 = vmatpush.msra.mxu0 0.0
  %164 = vmatpush.msra.mxu0 0.0
  %165 = vmatpush.msra.mxu0 0.0
  %166 = vmatpush.msra.mxu0 %v128
  %167 = vmatpush.msra.mxu0 %v127
  %168 = vmatpush.msra.mxu0 %v126
  %169 = vmatpush.msra.mxu0 %v125
  %170 = vmatpush.msra.mxu0 %v47
  %171 = vmatpush.msra.mxu0 %v46
  %172 = vmatpush.msra.mxu0 %v45
  %173 = vmatpush.msra.mxu0 %v44
  %174 = vmatpush.msra.mxu0 %v112
  %175 = vmatpush.msra.mxu0 %v111
  %176 = vmatpush.msra.mxu0 %v110
  %177 = vmatpush.msra.mxu0 %v109
  %178 = vmatmul.f32.gmra.mxu0 %v151
  %v179 = vpop.f32.mrf.mxu0
  %v180 = vadd.f32 %v132, %v179
  %181 = vmatmul.f32.gmra.mxu0 %v154
  %v182 = vpop.f32.mrf.mxu0
  %v183 = vadd.f32 %v137, %v182
  %184 = vmatmul.f32.gmra.mxu0 %v157
  %v185 = vpop.f32.mrf.mxu0
  %v186 = vadd.f32 %v142, %v185
  %187 = vmatmul.f32.gmra.mxu0 %v160
  %v188 = vpop.f32.mrf.mxu0
  %v189 = vadd.f32 %v147, %v188
  %190 = vdwg.mxu0
  %v191 = vmax.f32 %v180, 0.0
  %v192 = vmax.f32 %v183, 0.0
  %v193 = vmax.f32 %v186, 0.0
  %v194 = vmax.f32 %v189, 0.0
  %s195 = scalar_lea.vmem %s1, 32
  %v196 = vld [vmem:[%s195] sm:$0xff]
  %v197 = vld [vmem:[%s195 + $0x8] sm:$0xff]
  %v198 = vld [vmem:[%s195 + $0x10] sm:$0xff]
  %v199 = vld [vmem:[%s195 + $0x18] sm:$0xff]
  %200 = vrot.lane.b32.xlu0 %v191, 32
  %v201 = vpop.permute.xlu0 %200
  %v202 = vsel %vm68, %v201, %v191
  %203 = vrot.lane.b32.xlu0 %v192, 32
  %v204 = vpop.permute.xlu0 %203
  %v205 = vsel %vm68, %v204, %v192
  %206 = vrot.lane.b32.xlu0 %v193, 32
  %v207 = vpop.permute.xlu0 %206
  %v208 = vsel %vm68, %v207, %v193
  %209 = vrot.lane.b32.xlu0 %v194, 32
  %v210 = vpop.permute.xlu0 %209
  %v211 = vsel %vm68, %v210, %v194
  %212 = vrot.lane.b32.xlu0 %v202, 32
  %v213 = vpop.permute.xlu0 %212
  %214 = vrot.lane.b32.xlu0 %v205, 32
  %v215 = vpop.permute.xlu0 %214
  %216 = vrot.lane.b32.xlu0 %v208, 32
  %v217 = vpop.permute.xlu0 %216
  %218 = vrot.lane.b32.xlu0 %v211, 32
  %v219 = vpop.permute.xlu0 %218
  %v220 = vsel %vm68, %v213, %v191
  %v221 = vsel %vm68, %v215, %v192
  %v222 = vsel %vm68, %v217, %v193
  %v223 = vsel %vm68, %v219, %v194
  %228 = vrot.lane.b32.xlu0 %v220, 97
  %v229 = vpop.permute.xlu0 %228
  %230 = vrot.lane.b32.xlu0 %v221, 97
  %v231 = vpop.permute.xlu0 %230
  %232 = vrot.lane.b32.xlu0 %v222, 97
  %v233 = vpop.permute.xlu0 %232
  %234 = vrot.lane.b32.xlu0 %v223, 97
  %v235 = vpop.permute.xlu0 %234
  %v240 = vsel %vm62, 0.0, %v229
  %v241 = vsel %vm62, 0.0, %v231
  %v242 = vsel %vm62, 0.0, %v233
  %v243 = vsel %vm62, 0.0, %v235
  %244 = vrot.lane.b32.xlu0 %v220, 127
  %v245 = vpop.permute.xlu0 %244
  %246 = vrot.lane.b32.xlu0 %v221, 127
  %v247 = vpop.permute.xlu0 %246
  %248 = vrot.lane.b32.xlu0 %v222, 127
  %v249 = vpop.permute.xlu0 %248
  %250 = vrot.lane.b32.xlu0 %v223, 127
  %v251 = vpop.permute.xlu0 %250
  %v256 = vsel %vm63, 0.0, %v245
  %v257 = vsel %vm63, 0.0, %v247
  %v258 = vsel %vm63, 0.0, %v249
  %v259 = vsel %vm63, 0.0, %v251
  %260 = vset.pattern.permute.xlu0 65
  %261 = vperm.xlu0 %260, %v14
  %v262 = vpop.permute.xlu0 %261
  %264 = vset.pattern.permute.xlu0 65
  %265 = vperm.xlu0 %264, %v15
  %v266 = vpop.permute.xlu0 %265
  %268 = vset.pattern.permute.xlu0 65
  %269 = vperm.xlu0 %268, %v16
  %v270 = vpop.permute.xlu0 %269
  %272 = vset.pattern.permute.xlu0 65
  %273 = vperm.xlu0 %272, %v17
  %v274 = vpop.permute.xlu0 %273
  %v277 = vsel %vm149, %v196, 0
  %v280 = vsel %vm149, %v197, 0
  %v283 = vsel %vm149, %v198, 0
  %v286 = vsel %vm149, %v199, 0
  %288 = vmatpush.msra.mxu0 0.0
  %289 = vmatpush.msra.mxu0 0.0
  %290 = vmatpush.msra.mxu0 0.0
  %291 = vmatpush.msra.mxu0 0.0
  %292 = vmatpush.msra.mxu0 %v259
  %293 = vmatpush.msra.mxu0 %v258
  %294 = vmatpush.msra.mxu0 %v257
  %295 = vmatpush.msra.mxu0 %v256
  %296 = vmatpush.msra.mxu0 %v194
  %297 = vmatpush.msra.mxu0 %v193
  %298 = vmatpush.msra.mxu0 %v192
  %299 = vmatpush.msra.mxu0 %v191
  %300 = vmatpush.msra.mxu0 %v243
  %301 = vmatpush.msra.mxu0 %v242
  %302 = vmatpush.msra.mxu0 %v241
  %303 = vmatpush.msra.mxu0 %v240
  %304 = vmatmul.f32.gmra.mxu0 %v277
  %v305 = vpop.f32.mrf.mxu0
  %v306 = vadd.f32 %v262, %v305
  %307 = vmatmul.f32.gmra.mxu0 %v280
  %v308 = vpop.f32.mrf.mxu0
  %v309 = vadd.f32 %v266, %v308
  %310 = vmatmul.f32.gmra.mxu0 %v283
  %v311 = vpop.f32.mrf.mxu0
  %v312 = vadd.f32 %v270, %v311
  %313 = vmatmul.f32.gmra.mxu0 %v286
  %v314 = vpop.f32.mrf.mxu0
  %v315 = vadd.f32 %v274, %v314
  %316 = vdwg.mxu0
  %v317 = vsel %vm43, %v306, 0.0
  %318 = vadd.xlane.f32.xlu0 %v317
  %v319 = vpop.xlane.xlu0 %318
  %v320 = vsel %vm43, %v309, 0.0
  %321 = vadd.xlane.f32.xlu0 %v320
  %v322 = vpop.xlane.xlu0 %321
  %v323 = vsel %vm43, %v312, 0.0
  %324 = vadd.xlane.f32.xlu0 %v323
  %v325 = vpop.xlane.xlu0 %324
  %v326 = vsel %vm43, %v315, 0.0
  %327 = vadd.xlane.f32.xlu0 %v326
  %v328 = vpop.xlane.xlu0 %327
  %v329 = vrcp.pop 16.0
  %v330 = vmul.f32 16.0, %v329
  %v331 = vsub.f32 1.0, %v330
  %v332 = vmul.f32 %v329, %v331
  %v333 = vadd.f32 %v329, %v332
  %vm334 = vweird.f32 %v329
  %v335 = vsel %vm334, %v329, %v333
  %v336 = vmul.f32 %v319, %v335
  %v337 = vmul.f32 %v322, %v335
  %v338 = vmul.f32 %v325, %v335
  %v339 = vmul.f32 %v328, %v335
  %344 = vrot.lane.b32.xlu0 %v306, 112
  %v345 = vpop.permute.xlu0 %344
  %346 = vrot.lane.b32.xlu0 %v309, 112
  %v347 = vpop.permute.xlu0 %346
  %348 = vrot.lane.b32.xlu0 %v312, 112
  %v349 = vpop.permute.xlu0 %348
  %350 = vrot.lane.b32.xlu0 %v315, 112
  %v351 = vpop.permute.xlu0 %350
  %v356 = vsel %vm43, %v345, 0.0
  %357 = vadd.xlane.f32.xlu0 %v356
  %v358 = vpop.xlane.xlu0 %357
  %v359 = vsel %vm43, %v347, 0.0
  %360 = vadd.xlane.f32.xlu0 %v359
  %v361 = vpop.xlane.xlu0 %360
  %v362 = vsel %vm43, %v349, 0.0
  %363 = vadd.xlane.f32.xlu0 %v362
  %v364 = vpop.xlane.xlu0 %363
  %v365 = vsel %vm43, %v351, 0.0
  %366 = vadd.xlane.f32.xlu0 %v365
  %v367 = vpop.xlane.xlu0 %366
  %v368 = vmul.f32 %v358, %v335
  %v369 = vmul.f32 %v361, %v335
  %v370 = vmul.f32 %v364, %v335
  %v371 = vmul.f32 %v367, %v335
  %v372 = vsel %vm43, %v306, -inf
  %373 = vmax.xlane.f32.xlu0 %v372
  %v374 = vpop.xlane.xlu0 %373
  %v375 = vsel %vm43, %v309, -inf
  %376 = vmax.xlane.f32.xlu0 %v375
  %v377 = vpop.xlane.xlu0 %376
  %v378 = vsel %vm43, %v312, -inf
  %379 = vmax.xlane.f32.xlu0 %v378
  %v380 = vpop.xlane.xlu0 %379
  %v381 = vsel %vm43, %v315, -inf
  %382 = vmax.xlane.f32.xlu0 %v381
  %v383 = vpop.xlane.xlu0 %382
  %vm384 = vcmask 261248
  %v385 = vsel %vm384, %v306, -inf
  %386 = vmax.xlane.f32.xlu0 %v385
  %v387 = vpop.xlane.xlu0 %386
  %v388 = vsel %vm384, %v309, -inf
  %389 = vmax.xlane.f32.xlu0 %v388
  %v390 = vpop.xlane.xlu0 %389
  %v391 = vsel %vm384, %v312, -inf
  %392 = vmax.xlane.f32.xlu0 %v391
  %v393 = vpop.xlane.xlu0 %392
  %v394 = vsel %vm384, %v315, -inf
  %395 = vmax.xlane.f32.xlu0 %v394
  %v396 = vpop.xlane.xlu0 %395
  %vm397 = vcmask 7168
  %v398 = vsel %vm397, %v336, %v368
  %v399 = vsel %vm397, %v337, %v369
  %v400 = vsel %vm397, %v338, %v370
  %v401 = vsel %vm397, %v339, %v371
  %vm402 = vcmask 15360
  %v403 = vsel %vm402, %v398, %v374
  %v404 = vsel %vm402, %v399, %v377
  %v405 = vsel %vm402, %v400, %v380
  %v406 = vsel %vm402, %v401, %v383
  %vm407 = vcmask 23552
  %v408 = vsel %vm407, %v403, %v387
  %v409 = vsel %vm407, %v404, %v390
  %v410 = vsel %vm407, %v405, %v393
  %v411 = vsel %vm407, %v406, %v396
  %412 = vset.pattern.permute.xlu0 66
  %413 = vperm.xlu0 %412, %v14
  %v414 = vpop.permute.xlu0 %413
  %416 = vset.pattern.permute.xlu0 66
  %417 = vperm.xlu0 %416, %v15
  %v418 = vpop.permute.xlu0 %417
  %420 = vset.pattern.permute.xlu0 66
  %421 = vperm.xlu0 %420, %v16
  %v422 = vpop.permute.xlu0 %421
  %424 = vset.pattern.permute.xlu0 66
  %425 = vperm.xlu0 %424, %v17
  %v426 = vpop.permute.xlu0 %425
  %vm428 = vcmask 261120
  %v429 = vsel %vm428, %v14, 0
  %v431 = vsel %vm428, %v15, 0
  %v433 = vsel %vm428, %v16, 0
  %v435 = vsel %vm428, %v17, 0
  %437 = vmatpush.msra.mxu0 0.0
  %438 = vmatpush.msra.mxu0 0.0
  %439 = vmatpush.msra.mxu0 0.0
  %440 = vmatpush.msra.mxu0 0.0
  %441 = vmatpush.msra.mxu0 0.0
  %442 = vmatpush.msra.mxu0 0.0
  %443 = vmatpush.msra.mxu0 0.0
  %444 = vmatpush.msra.mxu0 0.0
  %445 = vmatpush.msra.mxu0 0.0
  %446 = vmatpush.msra.mxu0 0.0
  %447 = vmatpush.msra.mxu0 0.0
  %448 = vmatpush.msra.mxu0 0.0
  %449 = vmatpush.msra.mxu0 %v411
  %450 = vmatpush.msra.mxu0 %v410
  %451 = vmatpush.msra.mxu0 %v409
  %452 = vmatpush.msra.mxu0 %v408
  %453 = vmatmul.f32.gmra.mxu0 %v429
  %v454 = vpop.f32.mrf.mxu0
  %v455 = vadd.f32 %v414, %v454
  %456 = vmatmul.f32.gmra.mxu0 %v431
  %v457 = vpop.f32.mrf.mxu0
  %v458 = vadd.f32 %v418, %v457
  %459 = vmatmul.f32.gmra.mxu0 %v433
  %v460 = vpop.f32.mrf.mxu0
  %v461 = vadd.f32 %v422, %v460
  %462 = vmatmul.f32.gmra.mxu0 %v435
  %v463 = vpop.f32.mrf.mxu0
  %v464 = vadd.f32 %v426, %v463
  %465 = vdwg.mxu0
  %v466 = vmax.f32 %v455, 0.0
  %v467 = vmax.f32 %v458, 0.0
  %v468 = vmax.f32 %v461, 0.0
  %v469 = vmax.f32 %v464, 0.0
  %470 = vset.pattern.permute.xlu0 67
  %471 = vperm.xlu0 %470, %v14
  %v472 = vpop.permute.xlu0 %471
  %474 = vset.pattern.permute.xlu0 67
  %475 = vperm.xlu0 %474, %v15
  %v476 = vpop.permute.xlu0 %475
  %478 = vset.pattern.permute.xlu0 67
  %479 = vperm.xlu0 %478, %v16
  %v480 = vpop.permute.xlu0 %479
  %482 = vset.pattern.permute.xlu0 67
  %483 = vperm.xlu0 %482, %v17
  %v484 = vpop.permute.xlu0 %483
  %486 = vrot.lane.b32.xlu0 %v14, 96
  %v487 = vpop.permute.xlu0 %486
  %488 = vrot.lane.b32.xlu0 %v15, 96
  %v489 = vpop.permute.xlu0 %488
  %490 = vrot.lane.b32.xlu0 %v16, 96
  %v491 = vpop.permute.xlu0 %490
  %492 = vrot.lane.b32.xlu0 %v17, 96
  %v493 = vpop.permute.xlu0 %492
  %v494 = vsel %vm428, %v487, 0
  %v496 = vsel %vm428, %v489, 0
  %v498 = vsel %vm428, %v491, 0
  %v500 = vsel %vm428, %v493, 0
  %502 = vmatpush.msra.mxu0 0.0
  %503 = vmatpush.msra.mxu0 0.0
  %504 = vmatpush.msra.mxu0 0.0
  %505 = vmatpush.msra.mxu0 0.0
  %506 = vmatpush.msra.mxu0 0.0
  %507 = vmatpush.msra.mxu0 0.0
  %508 = vmatpush.msra.mxu0 0.0
  %509 = vmatpush.msra.mxu0 0.0
  %510 = vmatpush.msra.mxu0 0.0
  %511 = vmatpush.msra.mxu0 0.0
  %512 = vmatpush.msra.mxu0 0.0
  %513 = vmatpush.msra.mxu0 0.0
  %514 = vmatpush.msra.mxu0 %v469
  %515 = vmatpush.msra.mxu0 %v468
  %516 = vmatpush.msra.mxu0 %v467
  %517 = vmatpush.msra.mxu0 %v466
  %518 = vmatmul.f32.gmra.mxu0 %v494
  %v519 = vpop.f32.mrf.mxu0
  %v520 = vadd.f32 %v472, %v519
  %521 = vmatmul.f32.gmra.mxu0 %v496
  %v522 = vpop.f32.mrf.mxu0
  %v523 = vadd.f32 %v476, %v522
  %524 = vmatmul.f32.gmra.mxu0 %v498
  %v525 = vpop.f32.mrf.mxu0
  %v526 = vadd.f32 %v480, %v525
  %527 = vmatmul.f32.gmra.mxu0 %v500
  %v528 = vpop.f32.mrf.mxu0
  %v529 = vadd.f32 %v484, %v528
  %530 = vdwg.mxu0
  %535 = vrot.lane.b32.xlu0 %v520, 126
  %v536 = vpop.permute.xlu0 %535
  %537 = vrot.lane.b32.xlu0 %v523, 126
  %v538 = vpop.permute.xlu0 %537
  %539 = vrot.lane.b32.xlu0 %v526, 126
  %v540 = vpop.permute.xlu0 %539
  %541 = vrot.lane.b32.xlu0 %v529, 126
  %v542 = vpop.permute.xlu0 %541
  %v547 = vadd.f32 %v520, %v536
  %v548 = vadd.f32 %v523, %v538
  %v549 = vadd.f32 %v526, %v540
  %v550 = vadd.f32 %v529, %v542
  %v551 = vxor.u32 %v547, 2147483648
  %v552 = vxor.u32 %v548, 2147483648
  %v553 = vxor.u32 %v549, 2147483648
  %v554 = vxor.u32 %v550, 2147483648
  %v555 = vmul.f32 %v551, 1.442695
  %v556 = vpow.pop %v555
  %v557 = vmul.f32 %v552, 1.442695
  %v558 = vpow.pop %v557
  %v559 = vmul.f32 %v553, 1.442695
  %v560 = vpow.pop %v559
  %v561 = vmul.f32 %v554, 1.442695
  %v562 = vpow.pop %v561
  %v563 = vadd.f32 %v556, 1.0
  %v564 = vadd.f32 %v558, 1.0
  %v565 = vadd.f32 %v560, 1.0
  %v566 = vadd.f32 %v562, 1.0
  %v567 = vrcp.pop %v563
  %v568 = vmul.f32 %v563, %v567
  %v569 = vsub.f32 1.0, %v568
  %v570 = vmul.f32 %v567, %v569
  %v571 = vadd.f32 %v567, %v570
  %vm572 = vweird.f32 %v563
  %vm573 = vweird.f32 %v567
  %vm574 = vmor %vm572, %vm573
  %v575 = vsel %vm574, %v567, %v571
  %v576 = vand.u32 2147483647, %v563
  %vm577 = vcmp.eq.f32.partialorder %v576, 8.507059e+37
  %v578 = vand.u32 %v563, 2147483648
  %v579 = vor.u32 1.1754944e-38, %v578
  %v580 = vsel %vm577, %v579, %v575
  %v581 = vmul.f32 1.0, %v580
  %v582 = vrcp.pop %v564
  %v583 = vmul.f32 %v564, %v582
  %v584 = vsub.f32 1.0, %v583
  %v585 = vmul.f32 %v582, %v584
  %v586 = vadd.f32 %v582, %v585
  %vm587 = vweird.f32 %v564
  %vm588 = vweird.f32 %v582
  %vm589 = vmor %vm587, %vm588
  %v590 = vsel %vm589, %v582, %v586
  %v591 = vand.u32 2147483647, %v564
  %vm592 = vcmp.eq.f32.partialorder %v591, 8.507059e+37
  %v593 = vand.u32 %v564, 2147483648
  %v594 = vor.u32 1.1754944e-38, %v593
  %v595 = vsel %vm592, %v594, %v590
  %v596 = vmul.f32 1.0, %v595
  %v597 = vrcp.pop %v565
  %v598 = vmul.f32 %v565, %v597
  %v599 = vsub.f32 1.0, %v598
  %v600 = vmul.f32 %v597, %v599
  %v601 = vadd.f32 %v597, %v600
  %vm602 = vweird.f32 %v565
  %vm603 = vweird.f32 %v597
  %vm604 = vmor %vm602, %vm603
  %v605 = vsel %vm604, %v597, %v601
  %v606 = vand.u32 2147483647, %v565
  %vm607 = vcmp.eq.f32.partialorder %v606, 8.507059e+37
  %v608 = vand.u32 %v565, 2147483648
  %v609 = vor.u32 1.1754944e-38, %v608
  %v610 = vsel %vm607, %v609, %v605
  %v611 = vmul.f32 1.0, %v610
  %v612 = vrcp.pop %v566
  %v613 = vmul.f32 %v566, %v612
  %v614 = vsub.f32 1.0, %v613
  %v615 = vmul.f32 %v612, %v614
  %v616 = vadd.f32 %v612, %v615
  %vm617 = vweird.f32 %v566
  %vm618 = vweird.f32 %v612
  %vm619 = vmor %vm617, %vm618
  %v620 = vsel %vm619, %v612, %v616
  %v621 = vand.u32 2147483647, %v566
  %vm622 = vcmp.eq.f32.partialorder %v621, 8.507059e+37
  %v623 = vand.u32 %v566, 2147483648
  %v624 = vor.u32 1.1754944e-38, %v623
  %v625 = vsel %vm622, %v624, %v620
  %v626 = vmul.f32 1.0, %v625
  %628 = vset.pattern.permute.xlu0 0
  %629 = vperm.xlu0 %628, %v581
  %v630 = vpop.permute.xlu0 %629
  %633 = vset.pattern.permute.xlu0 0
  %634 = vperm.xlu0 %633, %v596
  %v635 = vpop.permute.xlu0 %634
  %638 = vset.pattern.permute.xlu0 0
  %639 = vperm.xlu0 %638, %v611
  %v640 = vpop.permute.xlu0 %639
  %643 = vset.pattern.permute.xlu0 0
  %644 = vperm.xlu0 %643, %v626
  %v645 = vpop.permute.xlu0 %644
  %647 = vset.pattern.permute.xlu0 1
  %648 = vperm.xlu0 %647, %v581
  %v649 = vpop.permute.xlu0 %648
  %651 = vset.pattern.permute.xlu0 1
  %652 = vperm.xlu0 %651, %v596
  %v653 = vpop.permute.xlu0 %652
  %655 = vset.pattern.permute.xlu0 1
  %656 = vperm.xlu0 %655, %v611
  %v657 = vpop.permute.xlu0 %656
  %659 = vset.pattern.permute.xlu0 1
  %660 = vperm.xlu0 %659, %v626
  %v661 = vpop.permute.xlu0 %660
  %v663 = vsel %vm43, %v630, %v649
  %v664 = vsel %vm43, %v635, %v653
  %v665 = vsel %vm43, %v640, %v657
  %v666 = vsel %vm43, %v645, %v661
  %v667 = vmul.f32 %v663, %v306
  %v668 = vmul.f32 %v664, %v309
  %v669 = vmul.f32 %v665, %v312
  %v670 = vmul.f32 %v666, %v315
  %v671 = vadd.f32 %v667, %v44
  %v672 = vadd.f32 %v668, %v45
  %v673 = vadd.f32 %v669, %v46
  %v674 = vadd.f32 %v670, %v47
  %v675 = vmax.f32 %v671, 0.0
  %v676 = vmax.f32 %v672, 0.0
  %v677 = vmax.f32 %v673, 0.0
  %v678 = vmax.f32 %v674, 0.0
  %679 = vst.msk [vmem:[%s3] sm:$0xff] %vm43, %v675
  %680 = vst.msk [vmem:[%s3 + $0x8] sm:$0xff] %vm43, %v676
  %681 = vst.msk [vmem:[%s3 + $0x10] sm:$0xff] %vm43, %v677
  %682 = vst.msk [vmem:[%s3 + $0x18] sm:$0xff] %vm43, %v678
  %687 = vrot.lane.b32.xlu0 %v675, 112
  %v688 = vpop.permute.xlu0 %687
  %689 = vrot.lane.b32.xlu0 %v676, 112
  %v690 = vpop.permute.xlu0 %689
  %691 = vrot.lane.b32.xlu0 %v677, 112
  %v692 = vpop.permute.xlu0 %691
  %693 = vrot.lane.b32.xlu0 %v678, 112
  %v694 = vpop.permute.xlu0 %693
  %s699 = scalar_lea.vmem %s3, 32
  %700 = vst.msk [vmem:[%s699] sm:$0xff] %vm43, %v688
  %701 = vst.msk [vmem:[%s699 + $0x8] sm:$0xff] %vm43, %v690
  %702 = vst.msk [vmem:[%s699 + $0x10] sm:$0xff] %vm43, %v692
  %703 = vst.msk [vmem:[%s699 + $0x18] sm:$0xff] %vm43, %v694
  // Predicated region
  $region14: #{resblock_forward.1} parent=0 // pred_check
    _
  $region15: #{resblock_forward.1} parent=0 // pred_check_branch
    %705 = sbr.rel (0) target = $region17
  $region16: #{resblock_forward.1} parent=0 // pred_region
    _
  $region17: #{resblock_forward.1} parent=0 // pred_fallthru
    _
  // Predicated region
  $region18: #{resblock_forward.1} parent=0 // pred_check
    _
  $region19: #{resblock_forward.1} parent=0 // pred_check_branch
    %707 = sbr.rel (0) target = $region21
  $region20: #{resblock_forward.1} parent=0 // pred_region
    _
  $region21: #{resblock_forward.1} parent=0 // pred_fallthru
    _

</llo_original>
